<compile_context>
chip_gen: v5e
topology: v5e:2x2
jax: 0.10.0
libtpu: 0.0.40
codegen_flags: <defaults>
</compile_context>

<pallas_src>
import jax
import jax.numpy as jnp
from jax.experimental import pallas as pl
from jax.experimental.pallas import tpu as pltpu

IN_FEATURES = 4
HIDDEN = 128
OUT_FEATURES = 2
OUT_PAD = 8          # kernel output lanes (cols 2..7 are zero, sliced off outside)
MAX_TILE = 1024      # rows per grid step (multiple of 8)


def dqn_kernel(x_ref, w1_ref, b1_ref, w2_ref, b2_ref, w3_ref, b3_ref, o_ref):
    # ---- Layer 1: (TB,4) @ (4,128) on the MXU, f32, + bias, ReLU ----
    h1 = jnp.dot(x_ref[...], w1_ref[...], preferred_element_type=jnp.float32)
    h1 = jnp.maximum(h1 + b1_ref[...], 0.0)

    # ---- Layer 2: bf16 MXU operands, f32 accumulate, f32 bias + ReLU ----
    h2 = jnp.dot(h1.astype(jnp.bfloat16), w2_ref[...],
                 preferred_element_type=jnp.float32)
    h2 = jnp.maximum(h2 + b2_ref[...], 0.0)

    # ---- Layer 3: (TB,128) @ (128,8) -> narrow (8-lane) output store ----
    out = jnp.dot(h2.astype(jnp.bfloat16), w3_ref[...],
                  preferred_element_type=jnp.float32)
    o_ref[...] = (out + b3_ref[...]).astype(o_ref.dtype)


def _round_up(n, m):
    return ((n + m - 1) // m) * m


def prepare_params(params):
    """One-time conversion of f32 params into kernel-layout params (cache the result)."""
    w1, b1, w2, b2, w3, b3 = params
    w2k = w2.astype(jnp.bfloat16)
    w3k = jnp.zeros((HIDDEN, OUT_PAD), jnp.bfloat16).at[:, :OUT_FEATURES].set(
        w3.astype(jnp.bfloat16))
    b3k = jnp.zeros((1, OUT_PAD), jnp.float32).at[:, :OUT_FEATURES].set(b3)
    return (w1, b1, w2k, b2, w3k, b3k)


@jax.jit
def dqn_forward(x, kparams):
    """Fused DQN forward. x: (B, 4) f32, kparams from prepare_params -> (B, 2) f32."""
    w1, b1, w2k, b2, w3k, b3k = kparams
    B = x.shape[0]

    # ---- Batch tiling (all static, trace-time) ----
    B8 = _round_up(B, 8)
    num_tiles = max(pl.cdiv(B8, MAX_TILE), 2 if B8 > 64 else 1)
    if num_tiles > 1 and num_tiles % 2 == 1:
        num_tiles += 1                    # even step count -> balanced v7x megacore split
    TB = _round_up(pl.cdiv(B8, num_tiles), 8)
    grid_n = pl.cdiv(B8, TB)
    B_pad = grid_n * TB                   # pad by < 8*num_tiles rows total
    if B_pad != B:
        x = jnp.pad(x, ((0, B_pad - B), (0, 0)))

    const = lambda i: (0, 0)              # weights/biases: fetched once, VMEM-resident

    flops = 2 * B_pad * (IN_FEATURES * HIDDEN + HIDDEN * HIDDEN + HIDDEN * OUT_PAD)
    bytes_accessed = (B_pad * IN_FEATURES * 4 + B_pad * OUT_PAD * 4
                      + w1.size * 4 + b1.size * 4
                      + w2k.size * 2 + b2.size * 4
                      + w3k.size * 2 + b3k.size * 4)

    out = pl.pallas_call(
        dqn_kernel,
        out_shape=jax.ShapeDtypeStruct((B_pad, OUT_PAD), jnp.float32),
        grid=(grid_n,),
        in_specs=[
            pl.BlockSpec((TB, IN_FEATURES), lambda i: (i, 0)),   # x: tiled over batch
            pl.BlockSpec(w1.shape, const),
            pl.BlockSpec(b1.shape, const),
            pl.BlockSpec(w2k.shape, const),
            pl.BlockSpec(b2.shape, const),
            pl.BlockSpec(w3k.shape, const),
            pl.BlockSpec(b3k.shape, const),
        ],
        out_specs=pl.BlockSpec((TB, OUT_PAD), lambda i: (i, 0)),
        compiler_params=pltpu.CompilerParams(
            dimension_semantics=("parallel",)),                  # megacore shard on v7x
        cost_estimate=pl.CostEstimate(
            flops=flops, transcendentals=0, bytes_accessed=bytes_accessed),
    )(x, w1, b1, w2k, b2, w3k, b3k)

    return out[:B, :OUT_FEATURES]


def init_params(key):
    """Deterministic init mimicking PyTorch nn.Linear default U(-1/sqrt(fan_in), +)."""
    keys = jax.random.split(key, 6)

    def linear(kw, kb, fan_in, fan_out):
        bound = 1.0 / jnp.sqrt(jnp.float32(fan_in))
        w = jax.random.uniform(kw, (fan_in, fan_out), jnp.float32, -bound, bound)
        b = jax.random.uniform(kb, (1, fan_out), jnp.float32, -bound, bound)
        return w, b

    w1, b1 = linear(keys[0], keys[1], IN_FEATURES, HIDDEN)
    w2, b2 = linear(keys[2], keys[3], HIDDEN, HIDDEN)
    w3, b3 = linear(keys[4], keys[5], HIDDEN, OUT_FEATURES)
    return (w1, b1, w2, b2, w3, b3)


def reference_forward(x, params):
    w1, b1, w2, b2, w3, b3 = params
    h1 = jnp.maximum(x @ w1 + b1, 0.0)
    h2 = jnp.maximum(h1 @ w2 + b2, 0.0)
    return h2 @ w3 + b3


# TODO(synk): act() (host-side epsilon-greedy random choice + argmax + .item()) stays
# outside the kernel; it is trivially q_values.argmax(-1) on the kernel output.

if __name__ == "__main__":
    key = jax.random.PRNGKey(0)
    k_params, k_x1, k_x2 = jax.random.split(key, 3)
    params = init_params(k_params)
    kparams = prepare_params(params)      # computed once, reused for every forward

    # Small CartPole-like batch (single-tile path).
    B = 8
    x = jax.random.normal(k_x1, (B, IN_FEATURES), jnp.float32)
    out = jax.block_until_ready(dqn_forward(x, kparams))
    ref = reference_forward(x, params)
    assert out.shape == (B, OUT_FEATURES)
    # bf16 MXU operands -> looser tolerance vs the pure-f32 reference.
    assert jnp.allclose(out, ref, atol=5e-2, rtol=5e-2), "mismatch vs reference (B=8)"

    # Non-multiple-of-tile batch exercising the multi-tile + padding path.
    B2 = 200
    x2 = jax.random.normal(k_x2, (B2, IN_FEATURES), jnp.float32)
    out2 = jax.block_until_ready(dqn_forward(x2, kparams))
    ref2 = reference_forward(x2, params)
    assert out2.shape == (B2, OUT_FEATURES)
    assert jnp.allclose(out2, ref2, atol=5e-2, rtol=5e-2), "mismatch vs reference (B=200)"

    print("KERNEL_OK")
</pallas_src>

<mosaic_0001>
module attributes {stable_mosaic.version = 11 : i64} {
  func.func @dqn_kernel(%arg0: i32, %arg1: memref<8x4xf32, #tpu.memory_space<vmem>>, %arg2: memref<4x128xf32, #tpu.memory_space<vmem>>, %arg3: memref<1x128xf32, #tpu.memory_space<vmem>>, %arg4: memref<128x128xbf16, #tpu.memory_space<vmem>>, %arg5: memref<1x128xf32, #tpu.memory_space<vmem>>, %arg6: memref<128x8xbf16, #tpu.memory_space<vmem>>, %arg7: memref<1x8xf32, #tpu.memory_space<vmem>>, %arg8: memref<8x8xf32, #tpu.memory_space<vmem>>) attributes {dimension_semantics = [#tpu.dimension_semantics<parallel>], iteration_bounds = array<i64: 1>, scalar_prefetch = 0 : i64, scratch_operands = 0 : i64, tpu.core_type = #tpu.core_type<tc>, window_params = [{transform_indices = @transform_0, window_bounds = array<i64: 8, 4>}, {pipeline_mode = #tpu.pipeline_mode<synchronous>, transform_indices = @transform_1, window_bounds = array<i64: 4, 128>}, {pipeline_mode = #tpu.pipeline_mode<synchronous>, transform_indices = @transform_2, window_bounds = array<i64: 1, 128>}, {pipeline_mode = #tpu.pipeline_mode<synchronous>, transform_indices = @transform_3, window_bounds = array<i64: 128, 128>}, {pipeline_mode = #tpu.pipeline_mode<synchronous>, transform_indices = @transform_4, window_bounds = array<i64: 1, 128>}, {pipeline_mode = #tpu.pipeline_mode<synchronous>, transform_indices = @transform_5, window_bounds = array<i64: 128, 8>}, {pipeline_mode = #tpu.pipeline_mode<synchronous>, transform_indices = @transform_6, window_bounds = array<i64: 1, 8>}, {transform_indices = @transform_7, window_bounds = array<i64: 8, 8>}]} {
    %c0 = arith.constant 0 : index
    %c0_0 = arith.constant 0 : index
    %0 = vector.load %arg1[%c0, %c0_0] : memref<8x4xf32, #tpu.memory_space<vmem>>, vector<8x4xf32>
    %c0_1 = arith.constant 0 : index
    %c0_2 = arith.constant 0 : index
    %1 = vector.load %arg2[%c0_1, %c0_2] : memref<4x128xf32, #tpu.memory_space<vmem>>, vector<4x128xf32>
    %cst = arith.constant dense<0.000000e+00> : vector<8x128xf32>
    %2 = tpu.matmul %0, %1, %cst {dimension_numbers = #tpu.dot_dimension_numbers<[1], [0], [0], [1], [0, 0, 1, 1], [], []>} : vector<8x4xf32>, vector<4x128xf32>, vector<8x128xf32> -> vector<8x128xf32>
    %c0_3 = arith.constant 0 : index
    %c0_4 = arith.constant 0 : index
    %3 = vector.load %arg3[%c0_3, %c0_4] : memref<1x128xf32, #tpu.memory_space<vmem>>, vector<1x128xf32>
    %4 = vector.broadcast %3 : vector<1x128xf32> to vector<8x128xf32>
    %5 = arith.addf %2, %4 : vector<8x128xf32>
    %cst_5 = arith.constant 0.000000e+00 : f32
    %6 = vector.broadcast %cst_5 : f32 to vector<8x128xf32>
    %7 = arith.maximumf %5, %6 : vector<8x128xf32>
    %8 = arith.truncf %7 : vector<8x128xf32> to vector<8x128xbf16>
    %c0_6 = arith.constant 0 : index
    %c0_7 = arith.constant 0 : index
    %9 = vector.load %arg4[%c0_6, %c0_7] : memref<128x128xbf16, #tpu.memory_space<vmem>>, vector<128x128xbf16>
    %cst_8 = arith.constant dense<0.000000e+00> : vector<8x128xf32>
    %10 = tpu.matmul %8, %9, %cst_8 {dimension_numbers = #tpu.dot_dimension_numbers<[1], [0], [0], [1], [0, 0, 1, 1], [], []>} : vector<8x128xbf16>, vector<128x128xbf16>, vector<8x128xf32> -> vector<8x128xf32>
    %c0_9 = arith.constant 0 : index
    %c0_10 = arith.constant 0 : index
    %11 = vector.load %arg5[%c0_9, %c0_10] : memref<1x128xf32, #tpu.memory_space<vmem>>, vector<1x128xf32>
    %12 = vector.broadcast %11 : vector<1x128xf32> to vector<8x128xf32>
    %13 = arith.addf %10, %12 : vector<8x128xf32>
    %cst_11 = arith.constant 0.000000e+00 : f32
    %14 = vector.broadcast %cst_11 : f32 to vector<8x128xf32>
    %15 = arith.maximumf %13, %14 : vector<8x128xf32>
    %16 = arith.truncf %15 : vector<8x128xf32> to vector<8x128xbf16>
    %c0_12 = arith.constant 0 : index
    %c0_13 = arith.constant 0 : index
    %17 = vector.load %arg6[%c0_12, %c0_13] : memref<128x8xbf16, #tpu.memory_space<vmem>>, vector<128x8xbf16>
    %cst_14 = arith.constant dense<0.000000e+00> : vector<8x8xf32>
    %18 = tpu.matmul %16, %17, %cst_14 {dimension_numbers = #tpu.dot_dimension_numbers<[1], [0], [0], [1], [0, 0, 1, 1], [], []>} : vector<8x128xbf16>, vector<128x8xbf16>, vector<8x8xf32> -> vector<8x8xf32>
    %c0_15 = arith.constant 0 : index
    %c0_16 = arith.constant 0 : index
    %19 = vector.load %arg7[%c0_15, %c0_16] : memref<1x8xf32, #tpu.memory_space<vmem>>, vector<1x8xf32>
    %20 = vector.broadcast %19 : vector<1x8xf32> to vector<8x8xf32>
    %21 = arith.addf %18, %20 : vector<8x8xf32>
    %c0_17 = arith.constant 0 : index
    %c0_18 = arith.constant 0 : index
    %22 = vector.load %arg8[%c0_17, %c0_18] : memref<8x8xf32, #tpu.memory_space<vmem>>, vector<8x8xf32>
    tpu.vector_store %arg8[%c0_17, %c0_18], %21 {strides = array<i32>} : memref<8x8xf32, #tpu.memory_space<vmem>>, vector<8x8xf32>,
    return
  }
  func.func @transform_0(%arg0: i32) -> (i32, i32) {
    %c0_i32 = arith.constant 0 : i32
    %c0_i32_0 = arith.constant 0 : i32
    return %arg0, %c0_i32 : i32, i32
  }
  func.func @transform_1(%arg0: i32) -> (i32, i32) {
    %c0_i32 = arith.constant 0 : i32
    %c0_i32_0 = arith.constant 0 : i32
    %c0_i32_1 = arith.constant 0 : i32
    return %c0_i32, %c0_i32_0 : i32, i32
  }
  func.func @transform_2(%arg0: i32) -> (i32, i32) {
    %c0_i32 = arith.constant 0 : i32
    %c0_i32_0 = arith.constant 0 : i32
    %c0_i32_1 = arith.constant 0 : i32
    return %c0_i32, %c0_i32_0 : i32, i32
  }
  func.func @transform_3(%arg0: i32) -> (i32, i32) {
    %c0_i32 = arith.constant 0 : i32
    %c0_i32_0 = arith.constant 0 : i32
    %c0_i32_1 = arith.constant 0 : i32
    return %c0_i32, %c0_i32_0 : i32, i32
  }
  func.func @transform_4(%arg0: i32) -> (i32, i32) {
    %c0_i32 = arith.constant 0 : i32
    %c0_i32_0 = arith.constant 0 : i32
    %c0_i32_1 = arith.constant 0 : i32
    return %c0_i32, %c0_i32_0 : i32, i32
  }
  func.func @transform_5(%arg0: i32) -> (i32, i32) {
    %c0_i32 = arith.constant 0 : i32
    %c0_i32_0 = arith.constant 0 : i32
    %c0_i32_1 = arith.constant 0 : i32
    return %c0_i32, %c0_i32_0 : i32, i32
  }
  func.func @transform_6(%arg0: i32) -> (i32, i32) {
    %c0_i32 = arith.constant 0 : i32
    %c0_i32_0 = arith.constant 0 : i32
    %c0_i32_1 = arith.constant 0 : i32
    return %c0_i32, %c0_i32_0 : i32, i32
  }
  func.func @transform_7(%arg0: i32) -> (i32, i32) {
    %c0_i32 = arith.constant 0 : i32
    %c0_i32_0 = arith.constant 0 : i32
    return %arg0, %c0_i32 : i32, i32
  }
}

</mosaic_0001>

<llo_original>
// kernel: dqn_forward.1
$region0: #{dqn_forward.1}
  #allocation0 [shape = 'u32[]', space=smem, size = 0x4, offset = 0x4, fixed_abs, tag = 'smem constant byte address 0x4 - core index']
  #allocation1 [shape = 'u32[72,128]{1,0:T(1,128)}', space=vmem, size = 0x9000, scoped, tag = 'internal scratch']
  %s0 = inlined_call_operand.vmem [shape: f32[8,4], index: 0, kind: input, shape index: {}]
  %s1 = inlined_call_operand.vmem [shape: f32[4,128], index: 1, kind: input, shape index: {}]
  %s2 = inlined_call_operand.vmem [shape: f32[1,128], index: 2, kind: input, shape index: {}]
  %s3 = inlined_call_operand.vmem [shape: bf16[128,128], index: 3, kind: input, shape index: {}]
  %s4 = inlined_call_operand.vmem [shape: f32[1,128], index: 4, kind: input, shape index: {}]
  %s5 = inlined_call_operand.vmem [shape: bf16[128,8], index: 5, kind: input, shape index: {}]
  %s6 = inlined_call_operand.vmem [shape: f32[1,8], index: 6, kind: input, shape index: {}]
  %s7 = inlined_call_operand.vmem [shape: f32[8,8], index: 7, kind: output, shape index: {}]
  %s8 = sld [smem:[#allocation0]]
  $region38: #{dqn_forward.1} parent=0
    _
  %s10 = ssub.s32 1, %s8
  %s11 = scalar_select 0, %s10, %s8
  // Predicated region
  $region2: #{dqn_forward.1} parent=0 // pred_check
    _
  $region3: #{dqn_forward.1} parent=0 // pred_check_branch
    %13 = sbr.rel (0) target = $region5
  $region4: #{dqn_forward.1} parent=0 // pred_region
    _
  $region5: #{dqn_forward.1} parent=0 // pred_fallthru
    _
  // Predicated region
  $region6: #{dqn_forward.1} parent=0 // pred_check
    _
  $region7: #{dqn_forward.1} parent=0 // pred_check_branch
    %15 = sbr.rel (0) target = $region9
  $region8: #{dqn_forward.1} parent=0 // pred_region
    _
  $region9: #{dqn_forward.1} parent=0 // pred_fallthru
    _
  // Predicated region
  $region10: #{dqn_forward.1} parent=0 // pred_check
    _
  $region11: #{dqn_forward.1} parent=0 // pred_check_branch
    %17 = sbr.rel (0) target = $region13
  $region12: #{dqn_forward.1} parent=0 // pred_region
    _
  $region13: #{dqn_forward.1} parent=0 // pred_fallthru
    _
  // Predicated region
  $region14: #{dqn_forward.1} parent=0 // pred_check
    _
  $region15: #{dqn_forward.1} parent=0 // pred_check_branch
    %19 = sbr.rel (0) target = $region17
  $region16: #{dqn_forward.1} parent=0 // pred_region
    _
  $region17: #{dqn_forward.1} parent=0 // pred_fallthru
    _
  // Predicated region
  $region18: #{dqn_forward.1} parent=0 // pred_check
    _
  $region19: #{dqn_forward.1} parent=0 // pred_check_branch
    %21 = sbr.rel (0) target = $region21
  $region20: #{dqn_forward.1} parent=0 // pred_region
    _
  $region21: #{dqn_forward.1} parent=0 // pred_fallthru
    _
  // Predicated region
  $region22: #{dqn_forward.1} parent=0 // pred_check
    _
  $region23: #{dqn_forward.1} parent=0 // pred_check_branch
    %23 = sbr.rel (0) target = $region25
  $region24: #{dqn_forward.1} parent=0 // pred_region
    _
  $region25: #{dqn_forward.1} parent=0 // pred_fallthru
    _
  // Predicated region
  $region26: #{dqn_forward.1} parent=0 // pred_check
    _
  $region27: #{dqn_forward.1} parent=0 // pred_check_branch
    %25 = sbr.rel (0) target = $region29
  $region28: #{dqn_forward.1} parent=0 // pred_region
    _
  $region29: #{dqn_forward.1} parent=0 // pred_fallthru
    _
  %v26 = vld [vmem:[%s0] sm:$0xff]
  %v27 = vld [vmem:[%s1] sm:$0xf]
  %v28 = vld [vmem:[%s2] sm:$0x1]
  %v30 = vperm.slane %v28, 0
  %vm32 = vcmask 31744
  %v34 = vsel %vm32, %v26, 0
  %vm36 = vcmask 1043456
  %v38 = vsel %vm36, %v27, 0
  %40 = vmatpush.msra.mxu0 0.0
  %41 = vmatpush.msra.mxu0 0.0
  %42 = vmatpush.msra.mxu0 0.0
  %43 = vmatpush.msra.mxu0 0.0
  %44 = vmatpush.msra.mxu0 0.0
  %45 = vmatpush.msra.mxu0 0.0
  %46 = vmatpush.msra.mxu0 0.0
  %47 = vmatpush.msra.mxu0 0.0
  %48 = vmatpush.msra.mxu0 0.0
  %49 = vmatpush.msra.mxu0 0.0
  %50 = vmatpush.msra.mxu0 0.0
  %51 = vmatpush.msra.mxu0 0.0
  %52 = vmatpush.msra.mxu0 0.0
  %53 = vmatpush.msra.mxu0 0.0
  %54 = vmatpush.msra.mxu0 0.0
  %55 = vmatpush.msra.mxu0 %v38
  %56 = vmatmul.f32.gmra.mxu0 %v34
  %v57 = vpop.f32.mrf.mxu0
  %v58 = vadd.f32 %v30, %v57
  %59 = vdwg.mxu0
  %v60 = vmax.f32 %v58, 0.0
  %v61 = vpack.c.bf16 %v60, %v60
  %v62 = vld [vmem:[%s3] sm:$0xf]
  %v63 = vld [vmem:[%s3 + $0x4] sm:$0xf]
  %v64 = vld [vmem:[%s3 + $0x8] sm:$0xf]
  %v65 = vld [vmem:[%s3 + $0xc] sm:$0xf]
  %v66 = vld [vmem:[%s3 + $0x10] sm:$0xf]
  %v67 = vld [vmem:[%s3 + $0x14] sm:$0xf]
  %v68 = vld [vmem:[%s3 + $0x18] sm:$0xf]
  %v69 = vld [vmem:[%s3 + $0x1c] sm:$0xf]
  %v70 = vld [vmem:[%s3 + $0x20] sm:$0xf]
  %v71 = vld [vmem:[%s3 + $0x24] sm:$0xf]
  %v72 = vld [vmem:[%s3 + $0x28] sm:$0xf]
  %v73 = vld [vmem:[%s3 + $0x2c] sm:$0xf]
  %v74 = vld [vmem:[%s3 + $0x30] sm:$0xf]
  %v75 = vld [vmem:[%s3 + $0x34] sm:$0xf]
  %v76 = vld [vmem:[%s3 + $0x38] sm:$0xf]
  %v77 = vld [vmem:[%s3 + $0x3c] sm:$0xf]
  %v78 = vld [vmem:[%s4] sm:$0x1]
  %v80 = vperm.slane %v78, 0
  %v98 = vunpack.c.l.b16 %v62
  %v99 = vunpack.c.l.b16 %v63
  %v100 = vunpack.c.l.b16 %v64
  %v101 = vunpack.c.l.b16 %v65
  %v102 = vunpack.c.l.b16 %v66
  %v103 = vunpack.c.l.b16 %v67
  %v104 = vunpack.c.l.b16 %v68
  %v105 = vunpack.c.l.b16 %v69
  %v106 = vunpack.c.l.b16 %v70
  %v107 = vunpack.c.l.b16 %v71
  %v108 = vunpack.c.l.b16 %v72
  %v109 = vunpack.c.l.b16 %v73
  %v110 = vunpack.c.l.b16 %v74
  %v111 = vunpack.c.l.b16 %v75
  %v112 = vunpack.c.l.b16 %v76
  %v113 = vunpack.c.l.b16 %v77
  %v114 = vpack.c.b16 %v99, %v98
  %v115 = vpack.c.b16 %v101, %v100
  %v116 = vpack.c.b16 %v103, %v102
  %v117 = vpack.c.b16 %v105, %v104
  %v118 = vpack.c.b16 %v107, %v106
  %v119 = vpack.c.b16 %v109, %v108
  %v120 = vpack.c.b16 %v111, %v110
  %v121 = vpack.c.b16 %v113, %v112
  %130 = vmatpush.bf16.msra.mxu0 %v121
  %131 = vmatpush.bf16.msra.mxu0 %v120
  %132 = vmatpush.bf16.msra.mxu0 %v119
  %133 = vmatpush.bf16.msra.mxu0 %v118
  %134 = vmatpush.bf16.msra.mxu0 %v117
  %135 = vmatpush.bf16.msra.mxu0 %v116
  %136 = vmatpush.bf16.msra.mxu0 %v115
  %137 = vmatpush.bf16.msra.mxu0 %v114
  %138 = vmatmul.bf16.gmra.mxu0 %v61
  %v139 = vpop.f32.mrf.mxu0
  %v140 = vadd.f32 %v80, %v139
  %v141 = vpop.f32.mrf.mxu0
  %142 = vdwg.mxu0
  %v143 = vmax.f32 %v140, 0.0
  %v144 = vpack.c.bf16 %v143, %v143
  %v145 = vld [vmem:[%s5] sm:$0xf]
  %v146 = vld [vmem:[%s5 + $0x4] sm:$0xf]
  %v147 = vld [vmem:[%s5 + $0x8] sm:$0xf]
  %v148 = vld [vmem:[%s5 + $0xc] sm:$0xf]
  %v149 = vld [vmem:[%s5 + $0x10] sm:$0xf]
  %v150 = vld [vmem:[%s5 + $0x14] sm:$0xf]
  %v151 = vld [vmem:[%s5 + $0x18] sm:$0xf]
  %v152 = vld [vmem:[%s5 + $0x1c] sm:$0xf]
  %v153 = vld [vmem:[%s5 + $0x20] sm:$0xf]
  %v154 = vld [vmem:[%s5 + $0x24] sm:$0xf]
  %v155 = vld [vmem:[%s5 + $0x28] sm:$0xf]
  %v156 = vld [vmem:[%s5 + $0x2c] sm:$0xf]
  %v157 = vld [vmem:[%s5 + $0x30] sm:$0xf]
  %v158 = vld [vmem:[%s5 + $0x34] sm:$0xf]
  %v159 = vld [vmem:[%s5 + $0x38] sm:$0xf]
  %v160 = vld [vmem:[%s5 + $0x3c] sm:$0xf]
  %v161 = vld [vmem:[%s6] sm:$0x1]
  %v163 = vperm.slane %v161, 0
  %v181 = vunpack.c.l.b16 %v145
  %v182 = vunpack.c.l.b16 %v146
  %v183 = vunpack.c.l.b16 %v147
  %v184 = vunpack.c.l.b16 %v148
  %v185 = vunpack.c.l.b16 %v149
  %v186 = vunpack.c.l.b16 %v150
  %v187 = vunpack.c.l.b16 %v151
  %v188 = vunpack.c.l.b16 %v152
  %v189 = vunpack.c.l.b16 %v153
  %v190 = vunpack.c.l.b16 %v154
  %v191 = vunpack.c.l.b16 %v155
  %v192 = vunpack.c.l.b16 %v156
  %v193 = vunpack.c.l.b16 %v157
  %v194 = vunpack.c.l.b16 %v158
  %v195 = vunpack.c.l.b16 %v159
  %v196 = vunpack.c.l.b16 %v160
  %v197 = vpack.c.b16 %v182, %v181
  %v198 = vpack.c.b16 %v184, %v183
  %v199 = vpack.c.b16 %v186, %v185
  %v200 = vpack.c.b16 %v188, %v187
  %v201 = vpack.c.b16 %v190, %v189
  %v202 = vpack.c.b16 %v192, %v191
  %v203 = vpack.c.b16 %v194, %v193
  %v204 = vpack.c.b16 %v196, %v195
  %213 = vmatpush.bf16.msra.mxu0 %v204
  %214 = vmatpush.bf16.msra.mxu0 %v203
  %215 = vmatpush.bf16.msra.mxu0 %v202
  %216 = vmatpush.bf16.msra.mxu0 %v201
  %217 = vmatpush.bf16.msra.mxu0 %v200
  %218 = vmatpush.bf16.msra.mxu0 %v199
  %219 = vmatpush.bf16.msra.mxu0 %v198
  %220 = vmatpush.bf16.msra.mxu0 %v197
  %221 = vmatmul.bf16.gmra.mxu0 %v144
  %v222 = vpop.f32.mrf.mxu0
  %v223 = vadd.f32 %v163, %v222
  %v224 = vpop.f32.mrf.mxu0
  %225 = vdwg.mxu0
  %vm226 = vcmask 64512
  %227 = vst.msk [vmem:[%s7] sm:$0xff] %vm226, %v223
  // Predicated region
  $region30: #{dqn_forward.1} parent=0 // pred_check
    _
  $region31: #{dqn_forward.1} parent=0 // pred_check_branch
    %229 = sbr.rel (0) target = $region33
  $region32: #{dqn_forward.1} parent=0 // pred_region
    _
  $region33: #{dqn_forward.1} parent=0 // pred_fallthru
    _
  // Predicated region
  $region34: #{dqn_forward.1} parent=0 // pred_check
    _
  $region35: #{dqn_forward.1} parent=0 // pred_check_branch
    %231 = sbr.rel (0) target = $region37
  $region36: #{dqn_forward.1} parent=0 // pred_region
    _
  $region37: #{dqn_forward.1} parent=0 // pred_fallthru
    _

</llo_original>
